<compile_context>
chip_gen: v6e
topology: v6e:2x2x1
jax: 0.10.0
libtpu: 0.0.40
codegen_flags: <defaults>
</compile_context>

<pallas_src>
import functools

import jax
import jax.numpy as jnp
from jax.experimental import pallas as pl
from jax.experimental.pallas import tpu as pltpu

LANE = 128
_VMEM_LIMIT = 32 * 1024 * 1024    # explicit scoped-VMEM limit (safe on v5e/v6e/v7x)
_VMEM_BUDGET = 24 * 1024 * 1024   # tile working-set budget, headroom under the limit


def _largest_divisor_leq(n, cap):
    cap = int(max(1, min(n, cap)))
    for d in range(cap, 0, -1):
        if n % d == 0:
            return d
    return 1


def _pick_spatial_tile(s, c, bblk, itemsize, n_bufs, budget):
    """Largest lane-dense spatial tile fitting the VMEM budget.

    Returns a multiple of 128 that divides s when s is 128-aligned; otherwise
    the full spatial extent (masked tail stores -- correct, just slower)."""
    if s % LANE != 0:
        return s
    chunk = n_bufs * bblk * c * LANE * itemsize     # bytes per 128-lane chunk
    cap = max(1, budget // max(1, chunk))
    return LANE * _largest_divisor_leq(s // LANE, cap)


# ----------------------------------------------------------------------------
# Kernels
# ----------------------------------------------------------------------------
def _se_fused_kernel(x_ref, w1t_ref, w2t_ref, o_ref, *, inv_s):
    """One pass: pool + MLP + scale.  x_ref/o_ref: (Bblk, C, S)."""
    x = x_ref[...]                                               # native dtype
    # squeeze: global average pool over spatial, f32 accumulation
    pooled = jnp.sum(x.astype(jnp.float32), axis=-1) * inv_s     # (Bblk, C)
    # excitation MLP: Linear(bias=False) -> ReLU -> Linear(bias=False) -> sigmoid
    h = jnp.dot(pooled, w1t_ref[...], preferred_element_type=jnp.float32)
    h = jnp.maximum(h, 0.0)                                      # (Bblk, Cr)
    g = jnp.dot(h, w2t_ref[...], preferred_element_type=jnp.float32)
    g = jax.nn.sigmoid(g)                                        # (Bblk, C)
    # scale: one small lanes->sublanes relayout per batch block, then a
    # lane-broadcast multiply in the input dtype
    o_ref[...] = (x * g[:, :, None].astype(x.dtype)).astype(o_ref.dtype)


def _se_gate_kernel(x_ref, w1t_ref, w2t_ref, g_ref, acc_ref, *, inv_s):
    """Two-pass, pass 1: spatially tiled pooling + MLP -> gate (Bblk, C, 1)."""
    j = pl.program_id(1)

    @pl.when(j == 0)
    def _():
        acc_ref[...] = jnp.zeros_like(acc_ref)

    acc_ref[...] += jnp.sum(x_ref[...].astype(jnp.float32), axis=-1)

    @pl.when(j == pl.num_programs(1) - 1)
    def _():
        pooled = acc_ref[...] * inv_s                            # (Bblk, C)
        h = jnp.dot(pooled, w1t_ref[...], preferred_element_type=jnp.float32)
        h = jnp.maximum(h, 0.0)
        g = jnp.dot(h, w2t_ref[...], preferred_element_type=jnp.float32)
        g = jax.nn.sigmoid(g)
        g_ref[...] = g[:, :, None].astype(g_ref.dtype)           # (Bblk, C, 1)


def _se_scale_kernel(x_ref, g_ref, o_ref):
    """Two-pass, pass 2: lane-dense scale.  Gate is (Bblk, C, 1): the broadcast
    over the spatial (lane) axis is free -- no per-step transposes."""
    o_ref[...] = (x_ref[...] * g_ref[...].astype(o_ref.dtype)).astype(o_ref.dtype)


# ----------------------------------------------------------------------------
# Wrapper
# ----------------------------------------------------------------------------
def se_block(x, w1, w2, *, force_two_pass=False):
    """SEBlock forward.  x: (B, C, H, W); w1: (C//r, C); w2: (C, C//r)."""
    b, c, h, w = x.shape
    s = h * w
    cr = w1.shape[0]
    itemsize = jnp.dtype(x.dtype).itemsize
    x_flat = x.reshape(b, c, s)
    # Pre-transpose the (tiny) weights once outside the kernel so the kernels
    # run plain row-major (Bblk, C) @ (C, Cr) @ (Cr, C) matmuls.
    w1t = jnp.transpose(w1)   # (C, Cr)
    w2t = jnp.transpose(w2)   # (Cr, C)

    # ---- fused single-pass path: whole (Bblk, C, S) slab resident ----------
    fused_bytes = 4 * c * s * itemsize   # x + out, double-buffered, per batch row
    if (not force_two_pass) and fused_bytes <= _VMEM_BUDGET:
        bblk = _largest_divisor_leq(b, min(8, _VMEM_BUDGET // fused_bytes))
        out = pl.pallas_call(
            functools.partial(_se_fused_kernel, inv_s=1.0 / float(s)),
            out_shape=jax.ShapeDtypeStruct((b, c, s), x.dtype),
            grid=(b // bblk,),
            in_specs=[
                pl.BlockSpec((bblk, c, s), lambda i: (i, 0, 0)),
                pl.BlockSpec((c, cr), lambda i: (0, 0)),
                pl.BlockSpec((cr, c), lambda i: (0, 0)),
            ],
            out_specs=pl.BlockSpec((bblk, c, s), lambda i: (i, 0, 0)),
            compiler_params=pltpu.CompilerParams(
                dimension_semantics=("parallel",),
                vmem_limit_bytes=_VMEM_LIMIT),
        )(x_flat, w1t, w2t)
        return out.reshape(b, c, h, w)

    # ---- two-pass path: pooled gate, then spatially tiled scale ------------
    # Pass 1: gate (B, C, 1) in f32.
    bblk_g = _largest_divisor_leq(b, 8)
    s_tile_g = _pick_spatial_tile(s, c, bblk_g, itemsize, n_bufs=2,
                                  budget=_VMEM_BUDGET)
    gate = pl.pallas_call(
        functools.partial(_se_gate_kernel, inv_s=1.0 / float(s)),
        out_shape=jax.ShapeDtypeStruct((b, c, 1), jnp.float32),
        grid=(b // bblk_g, s // s_tile_g),
        in_specs=[
            pl.BlockSpec((bblk_g, c, s_tile_g), lambda i, j: (i, 0, j)),
            pl.BlockSpec((c, cr), lambda i, j: (0, 0)),
            pl.BlockSpec((cr, c), lambda i, j: (0, 0)),
        ],
        out_specs=pl.BlockSpec((bblk_g, c, 1), lambda i, j: (i, 0, 0)),
        scratch_shapes=[pltpu.VMEM((bblk_g, c), jnp.float32)],
        compiler_params=pltpu.CompilerParams(
            dimension_semantics=("parallel", "arbitrary"),
            vmem_limit_bytes=_VMEM_LIMIT),
    )(x_flat, w1t, w2t)

    # Pass 2: spatially tiled scale; gate stays resident per batch block.
    bblk_s = _largest_divisor_leq(b, 8)
    s_tile_s = _pick_spatial_tile(s, c, bblk_s, itemsize, n_bufs=4,
                                  budget=_VMEM_BUDGET)
    out = pl.pallas_call(
        _se_scale_kernel,
        out_shape=jax.ShapeDtypeStruct((b, c, s), x.dtype),
        grid=(b // bblk_s, s // s_tile_s),
        in_specs=[
            pl.BlockSpec((bblk_s, c, s_tile_s), lambda i, j: (i, 0, j)),
            pl.BlockSpec((bblk_s, c, 1), lambda i, j: (i, 0, 0)),
        ],
        out_specs=pl.BlockSpec((bblk_s, c, s_tile_s), lambda i, j: (i, 0, j)),
        compiler_params=pltpu.CompilerParams(
            dimension_semantics=("parallel", "parallel"),
            vmem_limit_bytes=_VMEM_LIMIT),
    )(x_flat, gate)
    return out.reshape(b, c, h, w)


def se_block_ref(x, w1, w2):
    """Pure-JAX reference matching the PyTorch forward."""
    y = jnp.mean(x, axis=(2, 3))                       # (B, C)
    y = jnp.maximum(y @ w1.T, 0.0)                     # (B, C//r)
    y = jax.nn.sigmoid(y @ w2.T)                       # (B, C)
    return x * y[:, :, None, None]


if __name__ == "__main__":
    # SEBlock(channel=64, reduction=16) on a small, lane-dense feature map.
    B, C, H, W = 4, 64, 16, 16            # S = H*W = 256 (multiple of 128)
    reduction = 16
    Cr = C // reduction

    key = jax.random.PRNGKey(0)
    kx, k1, k2 = jax.random.split(key, 3)
    x = jax.random.normal(kx, (B, C, H, W), dtype=jnp.float32)
    w1 = jax.random.normal(k1, (Cr, C), dtype=jnp.float32) * 0.1   # fc[0].weight
    w2 = jax.random.normal(k2, (C, Cr), dtype=jnp.float32) * 0.1   # fc[2].weight

    ref = jax.block_until_ready(se_block_ref(x, w1, w2))

    # Fused single-pass path (small feature maps).
    out_fused = jax.block_until_ready(se_block(x, w1, w2))
    # Two-pass path (used automatically for large feature maps); forced here
    # so both kernel structures are compiled, run, and checked.
    out_two = jax.block_until_ready(se_block(x, w1, w2, force_two_pass=True))

    assert out_fused.shape == x.shape and out_fused.dtype == x.dtype
    assert out_two.shape == x.shape and out_two.dtype == x.dtype
    assert jnp.allclose(out_fused, ref, atol=1e-5, rtol=1e-5), "fused path mismatch"
    assert jnp.allclose(out_two, ref, atol=1e-5, rtol=1e-5), "two-pass path mismatch"
    print("KERNEL_OK")
</pallas_src>

<mosaic_0001>
module attributes {stable_mosaic.version = 11 : i64} {
  func.func @_se_fused_kernel(%arg0: i32, %arg1: memref<4x64x256xf32, #tpu.memory_space<vmem>>, %arg2: memref<64x4xf32, #tpu.memory_space<vmem>>, %arg3: memref<4x64xf32, #tpu.memory_space<vmem>>, %arg4: memref<4x64x256xf32, #tpu.memory_space<vmem>>) attributes {dimension_semantics = [#tpu.dimension_semantics<parallel>], iteration_bounds = array<i64: 1>, scalar_prefetch = 0 : i64, scratch_operands = 0 : i64, tpu.core_type = #tpu.core_type<tc>, window_params = [{transform_indices = @transform_0, window_bounds = array<i64: 4, 64, 256>}, {pipeline_mode = #tpu.pipeline_mode<synchronous>, transform_indices = @transform_1, window_bounds = array<i64: 64, 4>}, {pipeline_mode = #tpu.pipeline_mode<synchronous>, transform_indices = @transform_2, window_bounds = array<i64: 4, 64>}, {transform_indices = @transform_3, window_bounds = array<i64: 4, 64, 256>}]} {
    %c0 = arith.constant 0 : index
    %c0_0 = arith.constant 0 : index
    %c0_1 = arith.constant 0 : index
    %0 = vector.load %arg1[%c0, %c0_0, %c0_1] : memref<4x64x256xf32, #tpu.memory_space<vmem>>, vector<4x64x256xf32>
    %cst = arith.constant dense<0.000000e+00> : vector<4x64xf32>
    %1 = vector.multi_reduction <add>, %0, %cst [2] : vector<4x64x256xf32> to vector<4x64xf32>
    %cst_2 = arith.constant 3.906250e-03 : f32
    %2 = vector.broadcast %cst_2 : f32 to vector<4x64xf32>
    %3 = arith.mulf %1, %2 : vector<4x64xf32>
    %c0_3 = arith.constant 0 : index
    %c0_4 = arith.constant 0 : index
    %4 = vector.load %arg2[%c0_3, %c0_4] : memref<64x4xf32, #tpu.memory_space<vmem>>, vector<64x4xf32>
    %cst_5 = arith.constant dense<0.000000e+00> : vector<4x4xf32>
    %5 = tpu.matmul %3, %4, %cst_5 {dimension_numbers = #tpu.dot_dimension_numbers<[1], [0], [0], [1], [0, 0, 1, 1], [], []>} : vector<4x64xf32>, vector<64x4xf32>, vector<4x4xf32> -> vector<4x4xf32>
    %cst_6 = arith.constant 0.000000e+00 : f32
    %6 = vector.broadcast %cst_6 : f32 to vector<4x4xf32>
    %7 = arith.maximumf %5, %6 : vector<4x4xf32>
    %c0_7 = arith.constant 0 : index
    %c0_8 = arith.constant 0 : index
    %8 = vector.load %arg3[%c0_7, %c0_8] : memref<4x64xf32, #tpu.memory_space<vmem>>, vector<4x64xf32>
    %cst_9 = arith.constant dense<0.000000e+00> : vector<4x64xf32>
    %9 = tpu.matmul %7, %8, %cst_9 {dimension_numbers = #tpu.dot_dimension_numbers<[1], [0], [0], [1], [0, 0, 1, 1], [], []>} : vector<4x4xf32>, vector<4x64xf32>, vector<4x64xf32> -> vector<4x64xf32>
    %10 = arith.negf %9 : vector<4x64xf32>
    %11 = math.exp %10 : vector<4x64xf32>
    %cst_10 = arith.constant 1.000000e+00 : f32
    %12 = vector.broadcast %cst_10 : f32 to vector<4x64xf32>
    %13 = arith.addf %12, %11 : vector<4x64xf32>
    %14 = arith.divf %12, %13 : vector<4x64xf32>
    %15 = vector.shape_cast %14 : vector<4x64xf32> to vector<4x64x1xf32>
    %16 = vector.broadcast %15 : vector<4x64x1xf32> to vector<4x64x256xf32>
    %17 = arith.mulf %0, %16 : vector<4x64x256xf32>
    %c0_11 = arith.constant 0 : index
    %c0_12 = arith.constant 0 : index
    %c0_13 = arith.constant 0 : index
    %18 = vector.load %arg4[%c0_11, %c0_12, %c0_13] : memref<4x64x256xf32, #tpu.memory_space<vmem>>, vector<4x64x256xf32>
    tpu.vector_store %arg4[%c0_11, %c0_12, %c0_13], %17 {strides = array<i32>} : memref<4x64x256xf32, #tpu.memory_space<vmem>>, vector<4x64x256xf32>,
    return
  }
  func.func @transform_0(%arg0: i32) -> (i32, i32, i32) {
    %c0_i32 = arith.constant 0 : i32
    %c0_i32_0 = arith.constant 0 : i32
    %c0_i32_1 = arith.constant 0 : i32
    return %arg0, %c0_i32, %c0_i32_0 : i32, i32, i32
  }
  func.func @transform_1(%arg0: i32) -> (i32, i32) {
    %c0_i32 = arith.constant 0 : i32
    %c0_i32_0 = arith.constant 0 : i32
    %c0_i32_1 = arith.constant 0 : i32
    return %c0_i32, %c0_i32_0 : i32, i32
  }
  func.func @transform_2(%arg0: i32) -> (i32, i32) {
    %c0_i32 = arith.constant 0 : i32
    %c0_i32_0 = arith.constant 0 : i32
    %c0_i32_1 = arith.constant 0 : i32
    return %c0_i32, %c0_i32_0 : i32, i32
  }
  func.func @transform_3(%arg0: i32) -> (i32, i32, i32) {
    %c0_i32 = arith.constant 0 : i32
    %c0_i32_0 = arith.constant 0 : i32
    %c0_i32_1 = arith.constant 0 : i32
    return %arg0, %c0_i32, %c0_i32_0 : i32, i32, i32
  }
}

</mosaic_0001>

<llo_original>
// kernel: tpu_custom_call.1
$region0: #{tpu_custom_call.1}
  #allocation0 [shape = 'u32[]', space=smem, size = 0x4, offset = 0x4, fixed_abs, tag = 'smem constant byte address 0x4 - core index']
  #allocation1 [shape = 'u32[144,128]{1,0:T(1,128)}', space=vmem, size = 0x12000, scoped, tag = 'internal scratch']
  %s0 = inlined_call_operand.hbm [shape: f32[4,64,256], index: 0, kind: input, shape index: {}]
  %s1 = inlined_call_operand.vmem [shape: f32[64,4], index: 1, kind: input, shape index: {}]
  %s2 = inlined_call_operand.vmem [shape: f32[4,64], index: 2, kind: input, shape index: {}]
  %s3 = inlined_call_operand.hbm [shape: f32[4,64,256], index: 3, kind: output, shape index: {}]
  %s4 = sld [smem:[#allocation0]]
  $region26: #{tpu_custom_call.1} parent=0
    _
  %s6 = ssub.s32 1, %s4
  %s7 = scalar_select 0, %s6, %s4
  $region1: #{tpu_custom_call.1} parent=0
    #allocation2 [shape = 'u8[262144]{0}', space=vmem, size = 0x40000, scoped, tag = 'input window, operand 0, single buffered']
    #allocation3 [shape = 's32[1]{0}', space=sflag, size = 0x4, scoped, tag = 'scoped memory for tpu_custom_call.1']
    #allocation4 [shape = 's32[1]{0}', space=sflag, size = 0x4, scoped, tag = 'scoped memory for tpu_custom_call.1']
    #allocation5 [shape = 'u8[262144]{0}', space=vmem, size = 0x40000, scoped, tag = 'output window, operand 0, single buffered']
    %8 = vsyncpa [#allocation3], 0
    %9 = vsyncpa [#allocation4], 0
    // Predicated region
    $region2: #{tpu_custom_call.1} parent=1 // pred_check
      _
    $region3: #{tpu_custom_call.1} parent=1 // pred_check_branch
      %11 = sbr.rel (0) target = $region5
    $region4: #{tpu_custom_call.1} parent=1 // pred_region
      %s13 = ssub.s32 8192, 8192
      %14 = vsyncadd [#allocation3], %s13
      %s15 = sshll.u32 [#allocation2], 4
      %s16 = int_to_ptr.vmem [resolvable:$true] %s15
      %21 = dma.hbm_to_vmem [thread:$0]  %s0, 8192, %s16, [#allocation3], 256, 256, 16
    $region5: #{tpu_custom_call.1} parent=1 // pred_fallthru
      _
    // Predicated region
    $region6: #{tpu_custom_call.1} parent=1 // pred_check
      _
    $region7: #{tpu_custom_call.1} parent=1 // pred_check_branch
      %23 = sbr.rel (0) target = $region9
    $region8: #{tpu_custom_call.1} parent=1 // pred_region
      _
    $region9: #{tpu_custom_call.1} parent=1 // pred_fallthru
      _
    // Predicated region
    $region10: #{tpu_custom_call.1} parent=1 // pred_check
      _
    $region11: #{tpu_custom_call.1} parent=1 // pred_check_branch
      %25 = sbr.rel (0) target = $region13
    $region12: #{tpu_custom_call.1} parent=1 // pred_region
      _
    $region13: #{tpu_custom_call.1} parent=1 // pred_fallthru
      _
    // Predicated region
    $region14: #{tpu_custom_call.1} parent=1 // pred_check
      _
    $region15: #{tpu_custom_call.1} parent=1 // pred_check_branch
      %27 = sbr.rel (0) target = $region17
    $region16: #{tpu_custom_call.1} parent=1 // pred_region
      %28 = dma.done [#allocation3], 8192
    $region17: #{tpu_custom_call.1} parent=1 // pred_fallthru
      _
    %v29 = vld [vmem:[#allocation2] sm:$0xff]
    %v30 = vld [vmem:[#allocation2 + $0x8] sm:$0xff]
    %v31 = vld [vmem:[#allocation2 + $0x10] sm:$0xff]
    %v32 = vld [vmem:[#allocation2 + $0x18] sm:$0xff]
    %v33 = vld [vmem:[#allocation2 + $0x20] sm:$0xff]
    %v34 = vld [vmem:[#allocation2 + $0x28] sm:$0xff]
    %v35 = vld [vmem:[#allocation2 + $0x30] sm:$0xff]
    %v36 = vld [vmem:[#allocation2 + $0x38] sm:$0xff]
    %v37 = vld [vmem:[#allocation2 + $0x40] sm:$0xff]
    %v38 = vld [vmem:[#allocation2 + $0x48] sm:$0xff]
    %v39 = vld [vmem:[#allocation2 + $0x50] sm:$0xff]
    %v40 = vld [vmem:[#allocation2 + $0x58] sm:$0xff]
    %v41 = vld [vmem:[#allocation2 + $0x60] sm:$0xff]
    %v42 = vld [vmem:[#allocation2 + $0x68] sm:$0xff]
    %v43 = vld [vmem:[#allocation2 + $0x70] sm:$0xff]
    %v44 = vld [vmem:[#allocation2 + $0x78] sm:$0xff]
    %v45 = vld [vmem:[#allocation2 + $0x80] sm:$0xff]
    %v46 = vld [vmem:[#allocation2 + $0x88] sm:$0xff]
    %v47 = vld [vmem:[#allocation2 + $0x90] sm:$0xff]
    %v48 = vld [vmem:[#allocation2 + $0x98] sm:$0xff]
    %v49 = vld [vmem:[#allocation2 + $0xa0] sm:$0xff]
    %v50 = vld [vmem:[#allocation2 + $0xa8] sm:$0xff]
    %v51 = vld [vmem:[#allocation2 + $0xb0] sm:$0xff]
    %v52 = vld [vmem:[#allocation2 + $0xb8] sm:$0xff]
    %v53 = vld [vmem:[#allocation2 + $0xc0] sm:$0xff]
    %v54 = vld [vmem:[#allocation2 + $0xc8] sm:$0xff]
    %v55 = vld [vmem:[#allocation2 + $0xd0] sm:$0xff]
    %v56 = vld [vmem:[#allocation2 + $0xd8] sm:$0xff]
    %v57 = vld [vmem:[#allocation2 + $0xe0] sm:$0xff]
    %v58 = vld [vmem:[#allocation2 + $0xe8] sm:$0xff]
    %v59 = vld [vmem:[#allocation2 + $0xf0] sm:$0xff]
    %v60 = vld [vmem:[#allocation2 + $0xf8] sm:$0xff]
    %v61 = vld [vmem:[#allocation2 + $0x100] sm:$0xff]
    %v62 = vld [vmem:[#allocation2 + $0x108] sm:$0xff]
    %v63 = vld [vmem:[#allocation2 + $0x110] sm:$0xff]
    %v64 = vld [vmem:[#allocation2 + $0x118] sm:$0xff]
    %v65 = vld [vmem:[#allocation2 + $0x120] sm:$0xff]
    %v66 = vld [vmem:[#allocation2 + $0x128] sm:$0xff]
    %v67 = vld [vmem:[#allocation2 + $0x130] sm:$0xff]
    %v68 = vld [vmem:[#allocation2 + $0x138] sm:$0xff]
    %v69 = vld [vmem:[#allocation2 + $0x140] sm:$0xff]
    %v70 = vld [vmem:[#allocation2 + $0x148] sm:$0xff]
    %v71 = vld [vmem:[#allocation2 + $0x150] sm:$0xff]
    %v72 = vld [vmem:[#allocation2 + $0x158] sm:$0xff]
    %v73 = vld [vmem:[#allocation2 + $0x160] sm:$0xff]
    %v74 = vld [vmem:[#allocation2 + $0x168] sm:$0xff]
    %v75 = vld [vmem:[#allocation2 + $0x170] sm:$0xff]
    %v76 = vld [vmem:[#allocation2 + $0x178] sm:$0xff]
    %v77 = vld [vmem:[#allocation2 + $0x180] sm:$0xff]
    %v78 = vld [vmem:[#allocation2 + $0x188] sm:$0xff]
    %v79 = vld [vmem:[#allocation2 + $0x190] sm:$0xff]
    %v80 = vld [vmem:[#allocation2 + $0x198] sm:$0xff]
    %v81 = vld [vmem:[#allocation2 + $0x1a0] sm:$0xff]
    %v82 = vld [vmem:[#allocation2 + $0x1a8] sm:$0xff]
    %v83 = vld [vmem:[#allocation2 + $0x1b0] sm:$0xff]
    %v84 = vld [vmem:[#allocation2 + $0x1b8] sm:$0xff]
    %v85 = vld [vmem:[#allocation2 + $0x1c0] sm:$0xff]
    %v86 = vld [vmem:[#allocation2 + $0x1c8] sm:$0xff]
    %v87 = vld [vmem:[#allocation2 + $0x1d0] sm:$0xff]
    %v88 = vld [vmem:[#allocation2 + $0x1d8] sm:$0xff]
    %v89 = vld [vmem:[#allocation2 + $0x1e0] sm:$0xff]
    %v90 = vld [vmem:[#allocation2 + $0x1e8] sm:$0xff]
    %v91 = vld [vmem:[#allocation2 + $0x1f0] sm:$0xff]
    %v92 = vld [vmem:[#allocation2 + $0x1f8] sm:$0xff]
    %v93 = vadd.f32 %v29, %v30
    %94 = vadd.xlane.f32.xlu0 %v93
    %v95 = vpop.xlane.xlu0 %94
    %v96 = vadd.f32 %v31, %v32
    %97 = vadd.xlane.f32.xlu0 %v96
    %v98 = vpop.xlane.xlu0 %97
    %v99 = vadd.f32 %v33, %v34
    %100 = vadd.xlane.f32.xlu0 %v99
    %v101 = vpop.xlane.xlu0 %100
    %v102 = vadd.f32 %v35, %v36
    %103 = vadd.xlane.f32.xlu0 %v102
    %v104 = vpop.xlane.xlu0 %103
    %v105 = vadd.f32 %v37, %v38
    %106 = vadd.xlane.f32.xlu0 %v105
    %v107 = vpop.xlane.xlu0 %106
    %v108 = vadd.f32 %v39, %v40
    %109 = vadd.xlane.f32.xlu0 %v108
    %v110 = vpop.xlane.xlu0 %109
    %v111 = vadd.f32 %v41, %v42
    %112 = vadd.xlane.f32.xlu0 %v111
    %v113 = vpop.xlane.xlu0 %112
    %v114 = vadd.f32 %v43, %v44
    %115 = vadd.xlane.f32.xlu0 %v114
    %v116 = vpop.xlane.xlu0 %115
    %v117 = vadd.f32 %v45, %v46
    %118 = vadd.xlane.f32.xlu0 %v117
    %v119 = vpop.xlane.xlu0 %118
    %v120 = vadd.f32 %v47, %v48
    %121 = vadd.xlane.f32.xlu0 %v120
    %v122 = vpop.xlane.xlu0 %121
    %v123 = vadd.f32 %v49, %v50
    %124 = vadd.xlane.f32.xlu0 %v123
    %v125 = vpop.xlane.xlu0 %124
    %v126 = vadd.f32 %v51, %v52
    %127 = vadd.xlane.f32.xlu0 %v126
    %v128 = vpop.xlane.xlu0 %127
    %v129 = vadd.f32 %v53, %v54
    %130 = vadd.xlane.f32.xlu0 %v129
    %v131 = vpop.xlane.xlu0 %130
    %v132 = vadd.f32 %v55, %v56
    %133 = vadd.xlane.f32.xlu0 %v132
    %v134 = vpop.xlane.xlu0 %133
    %v135 = vadd.f32 %v57, %v58
    %136 = vadd.xlane.f32.xlu0 %v135
    %v137 = vpop.xlane.xlu0 %136
    %v138 = vadd.f32 %v59, %v60
    %139 = vadd.xlane.f32.xlu0 %v138
    %v140 = vpop.xlane.xlu0 %139
    %v141 = vadd.f32 %v61, %v62
    %142 = vadd.xlane.f32.xlu0 %v141
    %v143 = vpop.xlane.xlu0 %142
    %v144 = vadd.f32 %v63, %v64
    %145 = vadd.xlane.f32.xlu0 %v144
    %v146 = vpop.xlane.xlu0 %145
    %v147 = vadd.f32 %v65, %v66
    %148 = vadd.xlane.f32.xlu0 %v147
    %v149 = vpop.xlane.xlu0 %148
    %v150 = vadd.f32 %v67, %v68
    %151 = vadd.xlane.f32.xlu0 %v150
    %v152 = vpop.xlane.xlu0 %151
    %v153 = vadd.f32 %v69, %v70
    %154 = vadd.xlane.f32.xlu0 %v153
    %v155 = vpop.xlane.xlu0 %154
    %v156 = vadd.f32 %v71, %v72
    %157 = vadd.xlane.f32.xlu0 %v156
    %v158 = vpop.xlane.xlu0 %157
    %v159 = vadd.f32 %v73, %v74
    %160 = vadd.xlane.f32.xlu0 %v159
    %v161 = vpop.xlane.xlu0 %160
    %v162 = vadd.f32 %v75, %v76
    %163 = vadd.xlane.f32.xlu0 %v162
    %v164 = vpop.xlane.xlu0 %163
    %v165 = vadd.f32 %v77, %v78
    %166 = vadd.xlane.f32.xlu0 %v165
    %v167 = vpop.xlane.xlu0 %166
    %v168 = vadd.f32 %v79, %v80
    %169 = vadd.xlane.f32.xlu0 %v168
    %v170 = vpop.xlane.xlu0 %169
    %v171 = vadd.f32 %v81, %v82
    %172 = vadd.xlane.f32.xlu0 %v171
    %v173 = vpop.xlane.xlu0 %172
    %v174 = vadd.f32 %v83, %v84
    %175 = vadd.xlane.f32.xlu0 %v174
    %v176 = vpop.xlane.xlu0 %175
    %v177 = vadd.f32 %v85, %v86
    %178 = vadd.xlane.f32.xlu0 %v177
    %v179 = vpop.xlane.xlu0 %178
    %v180 = vadd.f32 %v87, %v88
    %181 = vadd.xlane.f32.xlu0 %v180
    %v182 = vpop.xlane.xlu0 %181
    %v183 = vadd.f32 %v89, %v90
    %184 = vadd.xlane.f32.xlu0 %v183
    %v185 = vpop.xlane.xlu0 %184
    %v186 = vadd.f32 %v91, %v92
    %187 = vadd.xlane.f32.xlu0 %v186
    %v188 = vpop.xlane.xlu0 %187
    %v189 = vmul.f32 %v95, 0.00390625
    %v190 = vmul.f32 %v98, 0.00390625
    %v191 = vmul.f32 %v101, 0.00390625
    %v192 = vmul.f32 %v104, 0.00390625
    %v193 = vmul.f32 %v107, 0.00390625
    %v194 = vmul.f32 %v110, 0.00390625
    %v195 = vmul.f32 %v113, 0.00390625
    %v196 = vmul.f32 %v116, 0.00390625
    %v197 = vmul.f32 %v119, 0.00390625
    %v198 = vmul.f32 %v122, 0.00390625
    %v199 = vmul.f32 %v125, 0.00390625
    %v200 = vmul.f32 %v128, 0.00390625
    %v201 = vmul.f32 %v131, 0.00390625
    %v202 = vmul.f32 %v134, 0.00390625
    %v203 = vmul.f32 %v137, 0.00390625
    %v204 = vmul.f32 %v140, 0.00390625
    %v205 = vmul.f32 %v143, 0.00390625
    %v206 = vmul.f32 %v146, 0.00390625
    %v207 = vmul.f32 %v149, 0.00390625
    %v208 = vmul.f32 %v152, 0.00390625
    %v209 = vmul.f32 %v155, 0.00390625
    %v210 = vmul.f32 %v158, 0.00390625
    %v211 = vmul.f32 %v161, 0.00390625
    %v212 = vmul.f32 %v164, 0.00390625
    %v213 = vmul.f32 %v167, 0.00390625
    %v214 = vmul.f32 %v170, 0.00390625
    %v215 = vmul.f32 %v173, 0.00390625
    %v216 = vmul.f32 %v176, 0.00390625
    %v217 = vmul.f32 %v179, 0.00390625
    %v218 = vmul.f32 %v182, 0.00390625
    %v219 = vmul.f32 %v185, 0.00390625
    %v220 = vmul.f32 %v188, 0.00390625
    %v221 = vld [vmem:[%s1] sm:$0xff]
    %v222 = vld [vmem:[%s1 + $0x8] sm:$0xff]
    %v223 = vld [vmem:[%s1 + $0x10] sm:$0xff]
    %v224 = vld [vmem:[%s1 + $0x18] sm:$0xff]
    %v225 = vld [vmem:[%s1 + $0x20] sm:$0xff]
    %v226 = vld [vmem:[%s1 + $0x28] sm:$0xff]
    %v227 = vld [vmem:[%s1 + $0x30] sm:$0xff]
    %v228 = vld [vmem:[%s1 + $0x38] sm:$0xff]
    %v261 = vlaneseq
    %v262 = vand.u32 %v261, 127
    %v263 = vlaneseq
    %v264 = vshrl.u32 %v263, 7
    %v265 = vsub.s32 %v262, %v264
    %v266 = vrot.slane %v189, %v265
    %v267 = vadd.s32 %v262, 4294967288
    %v268 = vlaneseq
    %v269 = vshrl.u32 %v268, 7
    %v270 = vsub.s32 %v267, %v269
    %v271 = vrot.slane %v190, %v270
    %vm272 = vcmask 130112
    %v273 = vsel %vm272, %v271, %v266
    %v274 = vadd.s32 %v262, 4294967280
    %v275 = vlaneseq
    %v276 = vshrl.u32 %v275, 7
    %v277 = vsub.s32 %v274, %v276
    %v278 = vrot.slane %v191, %v277
    %vm279 = vcmask 195712
    %v280 = vsel %vm279, %v278, %v273
    %v281 = vadd.s32 %v262, 4294967272
    %v282 = vlaneseq
    %v283 = vshrl.u32 %v282, 7
    %v284 = vsub.s32 %v281, %v283
    %v285 = vrot.slane %v192, %v284
    %vm286 = vcmask 261312
    %v287 = vsel %vm286, %v285, %v280
    %v288 = vadd.s32 %v262, 4294967264
    %v289 = vlaneseq
    %v290 = vshrl.u32 %v289, 7
    %v291 = vsub.s32 %v288, %v290
    %v292 = vrot.slane %v193, %v291
    %vm293 = vcmask 326912
    %v294 = vsel %vm293, %v292, %v287
    %v295 = vadd.s32 %v262, 4294967256
    %v296 = vlaneseq
    %v297 = vshrl.u32 %v296, 7
    %v298 = vsub.s32 %v295, %v297
    %v299 = vrot.slane %v194, %v298
    %vm300 = vcmask 392512
    %v301 = vsel %vm300, %v299, %v294
    %v302 = vadd.s32 %v262, 4294967248
    %v303 = vlaneseq
    %v304 = vshrl.u32 %v303, 7
    %v305 = vsub.s32 %v302, %v304
    %v306 = vrot.slane %v195, %v305
    %vm307 = vcmask 458112
    %v308 = vsel %vm307, %v306, %v301
    %v309 = vadd.s32 %v262, 4294967240
    %v310 = vlaneseq
    %v311 = vshrl.u32 %v310, 7
    %v312 = vsub.s32 %v309, %v311
    %v313 = vrot.slane %v196, %v312
    %vm314 = vcmask 523712
    %v315 = vsel %vm314, %v313, %v308
    %v316 = vlaneseq
    %v317 = vshrl.u32 %v316, 7
    %v318 = vsub.s32 %v262, %v317
    %v319 = vrot.slane %v197, %v318
    %v320 = vlaneseq
    %v321 = vshrl.u32 %v320, 7
    %v322 = vsub.s32 %v267, %v321
    %v323 = vrot.slane %v198, %v322
    %v324 = vsel %vm272, %v323, %v319
    %v325 = vlaneseq
    %v326 = vshrl.u32 %v325, 7
    %v327 = vsub.s32 %v274, %v326
    %v328 = vrot.slane %v199, %v327
    %v329 = vsel %vm279, %v328, %v324
    %v330 = vlaneseq
    %v331 = vshrl.u32 %v330, 7
    %v332 = vsub.s32 %v281, %v331
    %v333 = vrot.slane %v200, %v332
    %v334 = vsel %vm286, %v333, %v329
    %v335 = vlaneseq
    %v336 = vshrl.u32 %v335, 7
    %v337 = vsub.s32 %v288, %v336
    %v338 = vrot.slane %v201, %v337
    %v339 = vsel %vm293, %v338, %v334
    %v340 = vlaneseq
    %v341 = vshrl.u32 %v340, 7
    %v342 = vsub.s32 %v295, %v341
    %v343 = vrot.slane %v202, %v342
    %v344 = vsel %vm300, %v343, %v339
    %v345 = vlaneseq
    %v346 = vshrl.u32 %v345, 7
    %v347 = vsub.s32 %v302, %v346
    %v348 = vrot.slane %v203, %v347
    %v349 = vsel %vm307, %v348, %v344
    %v350 = vlaneseq
    %v351 = vshrl.u32 %v350, 7
    %v352 = vsub.s32 %v309, %v351
    %v353 = vrot.slane %v204, %v352
    %v354 = vsel %vm314, %v353, %v349
    %v355 = vlaneseq
    %v356 = vshrl.u32 %v355, 7
    %v357 = vsub.s32 %v262, %v356
    %v358 = vrot.slane %v205, %v357
    %v359 = vlaneseq
    %v360 = vshrl.u32 %v359, 7
    %v361 = vsub.s32 %v267, %v360
    %v362 = vrot.slane %v206, %v361
    %v363 = vsel %vm272, %v362, %v358
    %v364 = vlaneseq
    %v365 = vshrl.u32 %v364, 7
    %v366 = vsub.s32 %v274, %v365
    %v367 = vrot.slane %v207, %v366
    %v368 = vsel %vm279, %v367, %v363
    %v369 = vlaneseq
    %v370 = vshrl.u32 %v369, 7
    %v371 = vsub.s32 %v281, %v370
    %v372 = vrot.slane %v208, %v371
    %v373 = vsel %vm286, %v372, %v368
    %v374 = vlaneseq
    %v375 = vshrl.u32 %v374, 7
    %v376 = vsub.s32 %v288, %v375
    %v377 = vrot.slane %v209, %v376
    %v378 = vsel %vm293, %v377, %v373
    %v379 = vlaneseq
    %v380 = vshrl.u32 %v379, 7
    %v381 = vsub.s32 %v295, %v380
    %v382 = vrot.slane %v210, %v381
    %v383 = vsel %vm300, %v382, %v378
    %v384 = vlaneseq
    %v385 = vshrl.u32 %v384, 7
    %v386 = vsub.s32 %v302, %v385
    %v387 = vrot.slane %v211, %v386
    %v388 = vsel %vm307, %v387, %v383
    %v389 = vlaneseq
    %v390 = vshrl.u32 %v389, 7
    %v391 = vsub.s32 %v309, %v390
    %v392 = vrot.slane %v212, %v391
    %v393 = vsel %vm314, %v392, %v388
    %v394 = vlaneseq
    %v395 = vshrl.u32 %v394, 7
    %v396 = vsub.s32 %v262, %v395
    %v397 = vrot.slane %v213, %v396
    %v398 = vlaneseq
    %v399 = vshrl.u32 %v398, 7
    %v400 = vsub.s32 %v267, %v399
    %v401 = vrot.slane %v214, %v400
    %v402 = vsel %vm272, %v401, %v397
    %v403 = vlaneseq
    %v404 = vshrl.u32 %v403, 7
    %v405 = vsub.s32 %v274, %v404
    %v406 = vrot.slane %v215, %v405
    %v407 = vsel %vm279, %v406, %v402
    %v408 = vlaneseq
    %v409 = vshrl.u32 %v408, 7
    %v410 = vsub.s32 %v281, %v409
    %v411 = vrot.slane %v216, %v410
    %v412 = vsel %vm286, %v411, %v407
    %v413 = vlaneseq
    %v414 = vshrl.u32 %v413, 7
    %v415 = vsub.s32 %v288, %v414
    %v416 = vrot.slane %v217, %v415
    %v417 = vsel %vm293, %v416, %v412
    %v418 = vlaneseq
    %v419 = vshrl.u32 %v418, 7
    %v420 = vsub.s32 %v295, %v419
    %v421 = vrot.slane %v218, %v420
    %v422 = vsel %vm300, %v421, %v417
    %v423 = vlaneseq
    %v424 = vshrl.u32 %v423, 7
    %v425 = vsub.s32 %v302, %v424
    %v426 = vrot.slane %v219, %v425
    %v427 = vsel %vm307, %v426, %v422
    %v428 = vlaneseq
    %v429 = vshrl.u32 %v428, 7
    %v430 = vsub.s32 %v309, %v429
    %v431 = vrot.slane %v220, %v430
    %v432 = vsel %vm314, %v431, %v427
    %vm433 = vcmask 1041409
    %v434 = vsel %vm433, %v354, %v315
    %vm435 = vcmask 1042434
    %v436 = vsel %vm435, %v393, %v434
    %vm437 = vcmask 1043459
    %v438 = vsel %vm437, %v432, %v436
    %vm439 = vcmask 523264
    %v440 = vsel %vm439, %v438, 0
    %442 = vmatprep.subr.mxu0 0.0
    %443 = vmatpush1.msra.mxu0 0.0
    %444 = vmatprep.subr.mxu0 0.0
    %445 = vmatpush1.msra.mxu0 0.0
    %446 = vmatprep.subr.mxu0 0.0
    %447 = vmatpush1.msra.mxu0 0.0
    %448 = vmatprep.subr.mxu0 0.0
    %449 = vmatpush1.msra.mxu0 0.0
    %450 = vmatprep.subr.mxu0 0.0
    %451 = vmatpush1.msra.mxu0 0.0
    %452 = vmatprep.subr.mxu0 0.0
    %453 = vmatpush1.msra.mxu0 0.0
    %454 = vmatprep.subr.mxu0 0.0
    %455 = vmatpush1.msra.mxu0 0.0
    %456 = vmatprep.subr.mxu0 0.0
    %457 = vmatpush1.msra.mxu0 0.0
    %458 = vmatprep.subr.mxu0 0.0
    %459 = vmatpush1.msra.mxu0 %v228
    %460 = vmatprep.subr.mxu0 0.0
    %461 = vmatpush1.msra.mxu0 %v227
    %462 = vmatprep.subr.mxu0 0.0
    %463 = vmatpush1.msra.mxu0 %v226
    %464 = vmatprep.subr.mxu0 0.0
    %465 = vmatpush1.msra.mxu0 %v225
    %466 = vmatprep.subr.mxu0 0.0
    %467 = vmatpush1.msra.mxu0 %v224
    %468 = vmatprep.subr.mxu0 0.0
    %469 = vmatpush1.msra.mxu0 %v223
    %470 = vmatprep.subr.mxu0 0.0
    %471 = vmatpush1.msra.mxu0 %v222
    %472 = vmatprep.subr.mxu0 0.0
    %473 = vmatpush1.msra.mxu0 %v221
    %474 = vmatprep.subr.mxu0 0.0
    %475 = vmatpush2.msra.mxu0 0.0
    %476 = vmatprep.subr.mxu0 0.0
    %477 = vmatpush2.msra.mxu0 0.0
    %478 = vmatprep.subr.mxu0 0.0
    %479 = vmatpush2.msra.mxu0 0.0
    %480 = vmatprep.subr.mxu0 0.0
    %481 = vmatpush2.msra.mxu0 0.0
    %482 = vmatprep.subr.mxu0 0.0
    %483 = vmatpush2.msra.mxu0 0.0
    %484 = vmatprep.subr.mxu0 0.0
    %485 = vmatpush2.msra.mxu0 0.0
    %486 = vmatprep.subr.mxu0 0.0
    %487 = vmatpush2.msra.mxu0 0.0
    %488 = vmatprep.subr.mxu0 0.0
    %489 = vmatpush2.msra.mxu0 0.0
    %490 = vmatprep.subr.mxu0 0.0
    %491 = vmatpush2.msra.mxu0 0.0
    %492 = vmatprep.subr.mxu0 0.0
    %493 = vmatpush2.msra.mxu0 0.0
    %494 = vmatprep.subr.mxu0 0.0
    %495 = vmatpush2.msra.mxu0 0.0
    %496 = vmatprep.subr.mxu0 0.0
    %497 = vmatpush2.msra.mxu0 0.0
    %498 = vmatprep.subr.mxu0 0.0
    %499 = vmatpush2.msra.mxu0 0.0
    %500 = vmatprep.subr.mxu0 0.0
    %501 = vmatpush2.msra.mxu0 0.0
    %502 = vmatprep.subr.mxu0 0.0
    %503 = vmatpush2.msra.mxu0 0.0
    %504 = vmatprep.subr.mxu0 0.0
    %505 = vmatpush2.msra.mxu0 0.0
    %506 = vmatprep.mubr.f32.mxu0 0.0
    %507 = vmatmul.mubr.f32.gmra.mxu0 %v440
    %v508 = vpop.f32.mrf.mxu0
    %v509 = vadd.f32 0.0, %v508
    %v510 = vpop.f32.mrf.mxu0
    %511 = vdwg.mxu0
    %v512 = vmax.f32 %v509, 0.0
    %v513 = vld [vmem:[%s2] sm:$0xf]
    %vm514 = vcmask 31744
    %v516 = vsel %vm514, %v512, 0
    %vm518 = vcmask 1043456
    %v520 = vsel %vm518, %v513, 0
    %522 = vmatprep.subr.mxu0 0.0
    %523 = vmatpush1.msra.mxu0 0.0
    %524 = vmatprep.subr.mxu0 0.0
    %525 = vmatpush1.msra.mxu0 0.0
    %526 = vmatprep.subr.mxu0 0.0
    %527 = vmatpush1.msra.mxu0 0.0
    %528 = vmatprep.subr.mxu0 0.0
    %529 = vmatpush1.msra.mxu0 0.0
    %530 = vmatprep.subr.mxu0 0.0
    %531 = vmatpush1.msra.mxu0 0.0
    %532 = vmatprep.subr.mxu0 0.0
    %533 = vmatpush1.msra.mxu0 0.0
    %534 = vmatprep.subr.mxu0 0.0
    %535 = vmatpush1.msra.mxu0 0.0
    %536 = vmatprep.subr.mxu0 0.0
    %537 = vmatpush1.msra.mxu0 0.0
    %538 = vmatprep.subr.mxu0 0.0
    %539 = vmatpush1.msra.mxu0 0.0
    %540 = vmatprep.subr.mxu0 0.0
    %541 = vmatpush1.msra.mxu0 0.0
    %542 = vmatprep.subr.mxu0 0.0
    %543 = vmatpush1.msra.mxu0 0.0
    %544 = vmatprep.subr.mxu0 0.0
    %545 = vmatpush1.msra.mxu0 0.0
    %546 = vmatprep.subr.mxu0 0.0
    %547 = vmatpush1.msra.mxu0 0.0
    %548 = vmatprep.subr.mxu0 0.0
    %549 = vmatpush1.msra.mxu0 0.0
    %550 = vmatprep.subr.mxu0 0.0
    %551 = vmatpush1.msra.mxu0 0.0
    %552 = vmatprep.subr.mxu0 0.0
    %553 = vmatpush1.msra.mxu0 %v520
    %554 = vmatprep.subr.mxu0 0.0
    %555 = vmatpush2.msra.mxu0 0.0
    %556 = vmatprep.subr.mxu0 0.0
    %557 = vmatpush2.msra.mxu0 0.0
    %558 = vmatprep.subr.mxu0 0.0
    %559 = vmatpush2.msra.mxu0 0.0
    %560 = vmatprep.subr.mxu0 0.0
    %561 = vmatpush2.msra.mxu0 0.0
    %562 = vmatprep.subr.mxu0 0.0
    %563 = vmatpush2.msra.mxu0 0.0
    %564 = vmatprep.subr.mxu0 0.0
    %565 = vmatpush2.msra.mxu0 0.0
    %566 = vmatprep.subr.mxu0 0.0
    %567 = vmatpush2.msra.mxu0 0.0
    %568 = vmatprep.subr.mxu0 0.0
    %569 = vmatpush2.msra.mxu0 0.0
    %570 = vmatprep.subr.mxu0 0.0
    %571 = vmatpush2.msra.mxu0 0.0
    %572 = vmatprep.subr.mxu0 0.0
    %573 = vmatpush2.msra.mxu0 0.0
    %574 = vmatprep.subr.mxu0 0.0
    %575 = vmatpush2.msra.mxu0 0.0
    %576 = vmatprep.subr.mxu0 0.0
    %577 = vmatpush2.msra.mxu0 0.0
    %578 = vmatprep.subr.mxu0 0.0
    %579 = vmatpush2.msra.mxu0 0.0
    %580 = vmatprep.subr.mxu0 0.0
    %581 = vmatpush2.msra.mxu0 0.0
    %582 = vmatprep.subr.mxu0 0.0
    %583 = vmatpush2.msra.mxu0 0.0
    %584 = vmatprep.subr.mxu0 0.0
    %585 = vmatpush2.msra.mxu0 0.0
    %586 = vmatprep.mubr.f32.mxu0 0.0
    %587 = vmatmul.mubr.f32.gmra.mxu0 %v516
    %v588 = vpop.f32.mrf.mxu0
    %v589 = vadd.f32 0.0, %v588
    %v590 = vpop.f32.mrf.mxu0
    %591 = vdwg.mxu0
    %v592 = vxor.u32 %v589, 2147483648
    %v593 = vmul.f32 %v592, 1.442695
    %v594 = vpow.pop %v593
    %v595 = vadd.f32 %v594, 1.0
    %v596 = vrcp.pop %v595
    %v597 = vmul.f32 1.0, %v596
    %v598 = vlaneseq
    %v599 = vshrl.u32 %v598, 7
    %v600 = vsub.s32 0, %v599
    %v601 = vrot.slane %v597, %v600
    %603 = vbcast.lane.b32.xlu0 %v601, 256
    %v604 = vpop.permute.xlu0 %603
    %s606 = sor.u32 256, 8
    %607 = vbcast.lane.b32.xlu0 %v601, %s606
    %v608 = vpop.permute.xlu0 %607
    %s610 = sor.u32 256, 16
    %611 = vbcast.lane.b32.xlu0 %v601, %s610
    %v612 = vpop.permute.xlu0 %611
    %s614 = sor.u32 256, 24
    %615 = vbcast.lane.b32.xlu0 %v601, %s614
    %v616 = vpop.permute.xlu0 %615
    %s618 = sor.u32 256, 32
    %619 = vbcast.lane.b32.xlu0 %v601, %s618
    %v620 = vpop.permute.xlu0 %619
    %s622 = sor.u32 256, 40
    %623 = vbcast.lane.b32.xlu0 %v601, %s622
    %v624 = vpop.permute.xlu0 %623
    %s626 = sor.u32 256, 48
    %627 = vbcast.lane.b32.xlu0 %v601, %s626
    %v628 = vpop.permute.xlu0 %627
    %s630 = sor.u32 256, 56
    %631 = vbcast.lane.b32.xlu0 %v601, %s630
    %v632 = vpop.permute.xlu0 %631
    %v633 = vlaneseq
    %v634 = vshrl.u32 %v633, 7
    %v635 = vsub.s32 1, %v634
    %v636 = vrot.slane %v597, %v635
    %638 = vbcast.lane.b32.xlu0 %v636, 256
    %v639 = vpop.permute.xlu0 %638
    %s641 = sor.u32 256, 8
    %642 = vbcast.lane.b32.xlu0 %v636, %s641
    %v643 = vpop.permute.xlu0 %642
    %s645 = sor.u32 256, 16
    %646 = vbcast.lane.b32.xlu0 %v636, %s645
    %v647 = vpop.permute.xlu0 %646
    %s649 = sor.u32 256, 24
    %650 = vbcast.lane.b32.xlu0 %v636, %s649
    %v651 = vpop.permute.xlu0 %650
    %s653 = sor.u32 256, 32
    %654 = vbcast.lane.b32.xlu0 %v636, %s653
    %v655 = vpop.permute.xlu0 %654
    %s657 = sor.u32 256, 40
    %658 = vbcast.lane.b32.xlu0 %v636, %s657
    %v659 = vpop.permute.xlu0 %658
    %s661 = sor.u32 256, 48
    %662 = vbcast.lane.b32.xlu0 %v636, %s661
    %v663 = vpop.permute.xlu0 %662
    %s665 = sor.u32 256, 56
    %666 = vbcast.lane.b32.xlu0 %v636, %s665
    %v667 = vpop.permute.xlu0 %666
    %v668 = vlaneseq
    %v669 = vshrl.u32 %v668, 7
    %v670 = vsub.s32 2, %v669
    %v671 = vrot.slane %v597, %v670
    %673 = vbcast.lane.b32.xlu0 %v671, 256
    %v674 = vpop.permute.xlu0 %673
    %s676 = sor.u32 256, 8
    %677 = vbcast.lane.b32.xlu0 %v671, %s676
    %v678 = vpop.permute.xlu0 %677
    %s680 = sor.u32 256, 16
    %681 = vbcast.lane.b32.xlu0 %v671, %s680
    %v682 = vpop.permute.xlu0 %681
    %s684 = sor.u32 256, 24
    %685 = vbcast.lane.b32.xlu0 %v671, %s684
    %v686 = vpop.permute.xlu0 %685
    %s688 = sor.u32 256, 32
    %689 = vbcast.lane.b32.xlu0 %v671, %s688
    %v690 = vpop.permute.xlu0 %689
    %s692 = sor.u32 256, 40
    %693 = vbcast.lane.b32.xlu0 %v671, %s692
    %v694 = vpop.permute.xlu0 %693
    %s696 = sor.u32 256, 48
    %697 = vbcast.lane.b32.xlu0 %v671, %s696
    %v698 = vpop.permute.xlu0 %697
    %s700 = sor.u32 256, 56
    %701 = vbcast.lane.b32.xlu0 %v671, %s700
    %v702 = vpop.permute.xlu0 %701
    %v703 = vlaneseq
    %v704 = vshrl.u32 %v703, 7
    %v705 = vsub.s32 3, %v704
    %v706 = vrot.slane %v597, %v705
    %708 = vbcast.lane.b32.xlu0 %v706, 256
    %v709 = vpop.permute.xlu0 %708
    %s711 = sor.u32 256, 8
    %712 = vbcast.lane.b32.xlu0 %v706, %s711
    %v713 = vpop.permute.xlu0 %712
    %s715 = sor.u32 256, 16
    %716 = vbcast.lane.b32.xlu0 %v706, %s715
    %v717 = vpop.permute.xlu0 %716
    %s719 = sor.u32 256, 24
    %720 = vbcast.lane.b32.xlu0 %v706, %s719
    %v721 = vpop.permute.xlu0 %720
    %s723 = sor.u32 256, 32
    %724 = vbcast.lane.b32.xlu0 %v706, %s723
    %v725 = vpop.permute.xlu0 %724
    %s727 = sor.u32 256, 40
    %728 = vbcast.lane.b32.xlu0 %v706, %s727
    %v729 = vpop.permute.xlu0 %728
    %s731 = sor.u32 256, 48
    %732 = vbcast.lane.b32.xlu0 %v706, %s731
    %v733 = vpop.permute.xlu0 %732
    %s735 = sor.u32 256, 56
    %736 = vbcast.lane.b32.xlu0 %v706, %s735
    %v737 = vpop.permute.xlu0 %736
    %v738 = vmul.f32 %v29, %v604
    %v739 = vmul.f32 %v30, %v604
    %v740 = vmul.f32 %v31, %v608
    %v741 = vmul.f32 %v32, %v608
    %v742 = vmul.f32 %v33, %v612
    %v743 = vmul.f32 %v34, %v612
    %v744 = vmul.f32 %v35, %v616
    %v745 = vmul.f32 %v36, %v616
    %v746 = vmul.f32 %v37, %v620
    %v747 = vmul.f32 %v38, %v620
    %v748 = vmul.f32 %v39, %v624
    %v749 = vmul.f32 %v40, %v624
    %v750 = vmul.f32 %v41, %v628
    %v751 = vmul.f32 %v42, %v628
    %v752 = vmul.f32 %v43, %v632
    %v753 = vmul.f32 %v44, %v632
    %v754 = vmul.f32 %v45, %v639
    %v755 = vmul.f32 %v46, %v639
    %v756 = vmul.f32 %v47, %v643
    %v757 = vmul.f32 %v48, %v643
    %v758 = vmul.f32 %v49, %v647
    %v759 = vmul.f32 %v50, %v647
    %v760 = vmul.f32 %v51, %v651
    %v761 = vmul.f32 %v52, %v651
    %v762 = vmul.f32 %v53, %v655
    %v763 = vmul.f32 %v54, %v655
    %v764 = vmul.f32 %v55, %v659
    %v765 = vmul.f32 %v56, %v659
    %v766 = vmul.f32 %v57, %v663
    %v767 = vmul.f32 %v58, %v663
    %v768 = vmul.f32 %v59, %v667
    %v769 = vmul.f32 %v60, %v667
    %v770 = vmul.f32 %v61, %v674
    %v771 = vmul.f32 %v62, %v674
    %v772 = vmul.f32 %v63, %v678
    %v773 = vmul.f32 %v64, %v678
    %v774 = vmul.f32 %v65, %v682
    %v775 = vmul.f32 %v66, %v682
    %v776 = vmul.f32 %v67, %v686
    %v777 = vmul.f32 %v68, %v686
    %v778 = vmul.f32 %v69, %v690
    %v779 = vmul.f32 %v70, %v690
    %v780 = vmul.f32 %v71, %v694
    %v781 = vmul.f32 %v72, %v694
    %v782 = vmul.f32 %v73, %v698
    %v783 = vmul.f32 %v74, %v698
    %v784 = vmul.f32 %v75, %v702
    %v785 = vmul.f32 %v76, %v702
    %v786 = vmul.f32 %v77, %v709
    %v787 = vmul.f32 %v78, %v709
    %v788 = vmul.f32 %v79, %v713
    %v789 = vmul.f32 %v80, %v713
    %v790 = vmul.f32 %v81, %v717
    %v791 = vmul.f32 %v82, %v717
    %v792 = vmul.f32 %v83, %v721
    %v793 = vmul.f32 %v84, %v721
    %v794 = vmul.f32 %v85, %v725
    %v795 = vmul.f32 %v86, %v725
    %v796 = vmul.f32 %v87, %v729
    %v797 = vmul.f32 %v88, %v729
    %v798 = vmul.f32 %v89, %v733
    %v799 = vmul.f32 %v90, %v733
    %v800 = vmul.f32 %v91, %v737
    %v801 = vmul.f32 %v92, %v737
    %802 = vst [vmem:[#allocation5] sm:$0xff] %v738
    %803 = vst [vmem:[#allocation5 + $0x8] sm:$0xff] %v739
    %804 = vst [vmem:[#allocation5 + $0x10] sm:$0xff] %v740
    %805 = vst [vmem:[#allocation5 + $0x18] sm:$0xff] %v741
    %806 = vst [vmem:[#allocation5 + $0x20] sm:$0xff] %v742
    %807 = vst [vmem:[#allocation5 + $0x28] sm:$0xff] %v743
    %808 = vst [vmem:[#allocation5 + $0x30] sm:$0xff] %v744
    %809 = vst [vmem:[#allocation5 + $0x38] sm:$0xff] %v745
    %810 = vst [vmem:[#allocation5 + $0x40] sm:$0xff] %v746
    %811 = vst [vmem:[#allocation5 + $0x48] sm:$0xff] %v747
    %812 = vst [vmem:[#allocation5 + $0x50] sm:$0xff] %v748
    %813 = vst [vmem:[#allocation5 + $0x58] sm:$0xff] %v749
    %814 = vst [vmem:[#allocation5 + $0x60] sm:$0xff] %v750
    %815 = vst [vmem:[#allocation5 + $0x68] sm:$0xff] %v751
    %816 = vst [vmem:[#allocation5 + $0x70] sm:$0xff] %v752
    %817 = vst [vmem:[#allocation5 + $0x78] sm:$0xff] %v753
    %818 = vst [vmem:[#allocation5 + $0x80] sm:$0xff] %v754
    %819 = vst [vmem:[#allocation5 + $0x88] sm:$0xff] %v755
    %820 = vst [vmem:[#allocation5 + $0x90] sm:$0xff] %v756
    %821 = vst [vmem:[#allocation5 + $0x98] sm:$0xff] %v757
    %822 = vst [vmem:[#allocation5 + $0xa0] sm:$0xff] %v758
    %823 = vst [vmem:[#allocation5 + $0xa8] sm:$0xff] %v759
    %824 = vst [vmem:[#allocation5 + $0xb0] sm:$0xff] %v760
    %825 = vst [vmem:[#allocation5 + $0xb8] sm:$0xff] %v761
    %826 = vst [vmem:[#allocation5 + $0xc0] sm:$0xff] %v762
    %827 = vst [vmem:[#allocation5 + $0xc8] sm:$0xff] %v763
    %828 = vst [vmem:[#allocation5 + $0xd0] sm:$0xff] %v764
    %829 = vst [vmem:[#allocation5 + $0xd8] sm:$0xff] %v765
    %830 = vst [vmem:[#allocation5 + $0xe0] sm:$0xff] %v766
    %831 = vst [vmem:[#allocation5 + $0xe8] sm:$0xff] %v767
    %832 = vst [vmem:[#allocation5 + $0xf0] sm:$0xff] %v768
    %833 = vst [vmem:[#allocation5 + $0xf8] sm:$0xff] %v769
    %834 = vst [vmem:[#allocation5 + $0x100] sm:$0xff] %v770
    %835 = vst [vmem:[#allocation5 + $0x108] sm:$0xff] %v771
    %836 = vst [vmem:[#allocation5 + $0x110] sm:$0xff] %v772
    %837 = vst [vmem:[#allocation5 + $0x118] sm:$0xff] %v773
    %838 = vst [vmem:[#allocation5 + $0x120] sm:$0xff] %v774
    %839 = vst [vmem:[#allocation5 + $0x128] sm:$0xff] %v775
    %840 = vst [vmem:[#allocation5 + $0x130] sm:$0xff] %v776
    %841 = vst [vmem:[#allocation5 + $0x138] sm:$0xff] %v777
    %842 = vst [vmem:[#allocation5 + $0x140] sm:$0xff] %v778
    %843 = vst [vmem:[#allocation5 + $0x148] sm:$0xff] %v779
    %844 = vst [vmem:[#allocation5 + $0x150] sm:$0xff] %v780
    %845 = vst [vmem:[#allocation5 + $0x158] sm:$0xff] %v781
    %846 = vst [vmem:[#allocation5 + $0x160] sm:$0xff] %v782
    %847 = vst [vmem:[#allocation5 + $0x168] sm:$0xff] %v783
    %848 = vst [vmem:[#allocation5 + $0x170] sm:$0xff] %v784
    %849 = vst [vmem:[#allocation5 + $0x178] sm:$0xff] %v785
    %850 = vst [vmem:[#allocation5 + $0x180] sm:$0xff] %v786
    %851 = vst [vmem:[#allocation5 + $0x188] sm:$0xff] %v787
    %852 = vst [vmem:[#allocation5 + $0x190] sm:$0xff] %v788
    %853 = vst [vmem:[#allocation5 + $0x198] sm:$0xff] %v789
    %854 = vst [vmem:[#allocation5 + $0x1a0] sm:$0xff] %v790
    %855 = vst [vmem:[#allocation5 + $0x1a8] sm:$0xff] %v791
    %856 = vst [vmem:[#allocation5 + $0x1b0] sm:$0xff] %v792
    %857 = vst [vmem:[#allocation5 + $0x1b8] sm:$0xff] %v793
    %858 = vst [vmem:[#allocation5 + $0x1c0] sm:$0xff] %v794
    %859 = vst [vmem:[#allocation5 + $0x1c8] sm:$0xff] %v795
    %860 = vst [vmem:[#allocation5 + $0x1d0] sm:$0xff] %v796
    %861 = vst [vmem:[#allocation5 + $0x1d8] sm:$0xff] %v797
    %862 = vst [vmem:[#allocation5 + $0x1e0] sm:$0xff] %v798
    %863 = vst [vmem:[#allocation5 + $0x1e8] sm:$0xff] %v799
    %864 = vst [vmem:[#allocation5 + $0x1f0] sm:$0xff] %v800
    %865 = vst [vmem:[#allocation5 + $0x1f8] sm:$0xff] %v801
    // Predicated region
    $region18: #{tpu_custom_call.1} parent=1 // pred_check
      _
    $region19: #{tpu_custom_call.1} parent=1 // pred_check_branch
      %867 = sbr.rel (0) target = $region21
    $region20: #{tpu_custom_call.1} parent=1 // pred_region
      %s869 = ssub.s32 8192, 8192
      %870 = vsyncadd [#allocation4], %s869
      %s871 = sshll.u32 [#allocation5], 4
      %s872 = int_to_ptr.vmem [resolvable:$true] %s871
      %877 = dma.vmem_to_hbm [thread:$0]  %s872, 8192, %s3, [#allocation4], 256, 256, 16
    $region21: #{tpu_custom_call.1} parent=1 // pred_fallthru
      _
    // Predicated region
    $region22: #{tpu_custom_call.1} parent=1 // pred_check
      _
    $region23: #{tpu_custom_call.1} parent=1 // pred_check_branch
      %879 = sbr.rel (0) target = $region25
    $region24: #{tpu_custom_call.1} parent=1 // pred_region
      %880 = dma.done [#allocation4], 8192
    $region25: #{tpu_custom_call.1} parent=1 // pred_fallthru
      _
    %881 = vsyncpa [#allocation3], 1
    %882 = vsyncpa [#allocation4], 1

</llo_original>
